<compile_context>
chip_gen: v6e
topology: v6e:2x2x1
jax: 0.10.0
libtpu: 0.0.40
codegen_flags: <defaults>
</compile_context>

<pallas_src>
import functools

import jax
import jax.numpy as jnp
import numpy as np
from jax.experimental import pallas as pl
from jax.experimental.pallas import tpu as pltpu

EPS = 1e-5


def _vmem_capacity_bytes():
    """Physical VMEM per TensorCore (128 MiB v5e/v6e, 64 MiB v7x)."""
    try:
        return int(pltpu.get_tpu_info().vmem_capacity_bytes)
    except Exception:
        return 64 * 1024 * 1024  # conservative: assume the smallest part (v7x)


def _plan(hw_padded, f_g, f_l, f_int, in_isz, out_isz, feat_isz,
          vmem_capacity, use_feature_cache):
    """Pick (hw_tile, cache_feats, vmem_limit) from a generation-aware budget."""
    def rup(x, m):
        return (x + m - 1) // m * m

    if vmem_capacity >= 100 * 2**20:      # v5e / v6e: 128 MiB VMEM
        vmem_limit = 96 * 2**20
    else:                                 # v7x: 64 MiB per TensorCore
        vmem_limit = 36 * 2**20
    budget = vmem_limit - 6 * 2**20       # headroom for compiler scratch

    f_int8 = rup(f_int, 8)
    f_int_c = rup(f_int, 16 if feat_isz == 2 else 8)   # cache sublane packing

    # thw-independent bytes: double-buffered weight blocks, psi_buf (its size-1
    # sublane dim pads to 8), tiny moment accumulators, slack.
    fixed = (2 * (f_int8 * rup(f_g, 128) + f_int8 * rup(f_l, 128)) * in_isz
             + f_int8 * 128 * 4
             + 8 * hw_padded * 4
             + 8 * f_int8 * 128 * 4
             + 512 * 1024)
    cache_bytes = 2 * f_int_c * hw_padded * feat_isz

    # thw-proportional bytes: double-buffered g/s/out blocks, ~6 live f32
    # (F_int, thw) temporaries in phase 1, phase-2 temporaries.
    per_lane = (2 * f_g * in_isz + 2 * f_l * in_isz + 2 * f_l * out_isz
                + 6 * f_int8 * 4 + 2 * f_l * 4)

    def best_tile(avail):
        if avail <= 0:
            return 0
        cap = min((avail // per_lane) // 128 * 128, hw_padded)
        best, c = 0, 128
        while c <= cap:
            if hw_padded % c == 0:
                best = c
            c += 128
        return best

    if use_feature_cache is not False:
        thw = best_tile(budget - fixed - cache_bytes)
        if thw >= 128:
            return thw, True, vmem_limit
    thw = best_tile(budget - fixed)
    if thw < 128:
        thw = 128  # best effort for extreme configs
    return thw, False, vmem_limit


def _skip_attention_kernel(g_ref, s_ref, wg_ref, wx_ref, wp_ref, out_ref,
                           gsum, gsq, ssum, ssq, psum, psq, psi_buf,
                           *feat_refs,
                           hw_total, thw, cache_feats, mask_tail, apply_dtype):
    """One (sample, phase, hw-tile) grid step; C on sublanes, HW on lanes."""
    p = pl.program_id(1)
    t = pl.program_id(2)
    inv_hw = jnp.float32(1.0 / hw_total)

    @pl.when(jnp.logical_and(p == 0, t == 0))
    def _init():
        gsum[...] = jnp.zeros_like(gsum)
        gsq[...] = jnp.zeros_like(gsq)
        ssum[...] = jnp.zeros_like(ssum)
        ssq[...] = jnp.zeros_like(ssq)
        psum[...] = jnp.zeros_like(psum)
        psq[...] = jnp.zeros_like(psq)

    @pl.when(p == 0)
    def _branch_matmuls_and_stats():
        # (F_int, C_in) @ (C_in, THW) -> (F_int, THW), f32 accumulation.
        gf = jnp.dot(wg_ref[...], g_ref[0], preferred_element_type=jnp.float32)
        sf = jnp.dot(wx_ref[...], s_ref[0], preferred_element_type=jnp.float32)
        if cache_feats:
            gf_cache, sf_cache = feat_refs
            gf_cache[t] = gf.astype(gf_cache.dtype)
            sf_cache[t] = sf.astype(sf_cache.dtype)
        # One-pass moments per channel (lane-axis reductions hide under DMA).
        gsum[...] += jnp.sum(gf, axis=1, keepdims=True)
        gsq[...] += jnp.sum(gf * gf, axis=1, keepdims=True)
        ssum[...] += jnp.sum(sf, axis=1, keepdims=True)
        ssq[...] += jnp.sum(sf * sf, axis=1, keepdims=True)

    @pl.when(p == 1)
    def _normalize_and_project():
        if cache_feats:
            gf_cache, sf_cache = feat_refs
            gf = gf_cache[t].astype(jnp.float32)
            sf = sf_cache[t].astype(jnp.float32)
        else:
            gf = jnp.dot(wg_ref[...], g_ref[0], preferred_element_type=jnp.float32)
            sf = jnp.dot(wx_ref[...], s_ref[0], preferred_element_type=jnp.float32)
        gmean = gsum[...] * inv_hw
        gvar = jnp.maximum(gsq[...] * inv_hw - gmean * gmean, 0.0)
        smean = ssum[...] * inv_hw
        svar = jnp.maximum(ssq[...] * inv_hw - smean * smean, 0.0)
        # 1x1-conv biases cancel under affine-free InstanceNorm -> omitted.
        gn = (gf - gmean) * jax.lax.rsqrt(gvar + EPS)
        sn = (sf - smean) * jax.lax.rsqrt(svar + EPS)
        mixed = jnp.maximum(gn + sn, 0.0)
        # psi 1x1 conv has output width 1: VPU multiply + sublane reduce instead
        # of a 1-lane MXU matmul.
        praw = jnp.sum(wp_ref[...] * mixed, axis=0, keepdims=True)      # (1, THW)
        psi_buf[t] = praw
        if mask_tail:
            # Padded pixels have gf = sf = 0 (branch moments untouched) but their
            # normalized values are nonzero; mask them out of the psi statistics.
            lane = jax.lax.broadcasted_iota(jnp.int32, praw.shape, 1) + t * thw
            praw = jnp.where(lane < hw_total, praw, 0.0)
        psum[...] += jnp.sum(praw, axis=1, keepdims=True)
        psq[...] += jnp.sum(praw * praw, axis=1, keepdims=True)

    @pl.when(p == 2)
    def _apply_attention():
        pmean = psum[...] * inv_hw                                      # (1, 1)
        pvar = jnp.maximum(psq[...] * inv_hw - pmean * pmean, 0.0)
        pn = (psi_buf[t] - pmean) * jax.lax.rsqrt(pvar + EPS)           # (1, THW)
        pn = jnp.maximum(pn, -60.0)          # keep exp finite for extreme tails
        # Sigmoid: EUP exp + approx reciprocal; one Newton step restores f32
        # accuracy while the divide stays off the VALU slots.
        denom = 1.0 + jnp.exp(-pn)
        r = pl.reciprocal(denom, approx=True)
        atten = r * (2.0 - denom * r)
        att = atten.astype(apply_dtype)
        out_ref[0] = (att * s_ref[0].astype(apply_dtype)).astype(out_ref.dtype)


def skip_attention_block(g_nchw, skip_nchw, params, *,
                         compute_dtype=jnp.bfloat16, use_feature_cache=None):
    """SkipAttentionBlock forward.

    g_nchw:    (N, F_g, H, W)
    skip_nchw: (N, F_l, H, W)
    params = (wg, bg, wx, bx, wp, bp) in PyTorch orientation:
      wg: (F_int, F_g), bg: (F_int,), wx: (F_int, F_l), bx: (F_int,),
      wp: (1, F_int),   bp: (1,)
    Biases are mathematical no-ops (per-channel constants immediately before an
    affine-free InstanceNorm2d) and are not fed to the kernel.

    compute_dtype (default bf16): dtype of the streamed activations / MXU inputs
    and of the output; statistics, normalization and the sigmoid stay in f32.
    The cast is free when the producer already emits bf16.  Pass
    compute_dtype=jnp.float32 (or None) for a full-precision path.
    use_feature_cache: None = auto (on when it fits VMEM), True/False to force.
    """
    wg, _bg, wx, _bx, wp, _bp = params
    N, F_g, H, W = g_nchw.shape
    F_l = skip_nchw.shape[1]
    F_int = wg.shape[0]
    HW = H * W
    hw_padded = (HW + 127) // 128 * 128

    # NCHW-native: pure reshapes, no NCHW<->NHWC transposes.
    g = g_nchw.reshape(N, F_g, HW)
    s = skip_nchw.reshape(N, F_l, HW)
    wp_col = wp.reshape(F_int, 1).astype(jnp.float32)

    if compute_dtype is not None:
        g = g.astype(compute_dtype)
        s = s.astype(compute_dtype)
        wg = wg.astype(compute_dtype)
        wx = wx.astype(compute_dtype)
    out_dtype = s.dtype
    feat_dtype = s.dtype
    apply_dtype = jnp.bfloat16 if out_dtype == jnp.bfloat16 else jnp.float32

    if hw_padded != HW:
        pad = hw_padded - HW
        g = jnp.pad(g, ((0, 0), (0, 0), (0, pad)))
        s = jnp.pad(s, ((0, 0), (0, 0), (0, pad)))

    thw, cache_feats, vmem_limit = _plan(
        hw_padded, F_g, F_l, F_int,
        in_isz=jnp.dtype(g.dtype).itemsize,
        out_isz=jnp.dtype(out_dtype).itemsize,
        feat_isz=jnp.dtype(feat_dtype).itemsize,
        vmem_capacity=_vmem_capacity_bytes(),
        use_feature_cache=use_feature_cache)
    if use_feature_cache is False:
        cache_feats = False
    n_tiles = hw_padded // thw
    last = n_tiles - 1

    kernel = functools.partial(
        _skip_attention_kernel, hw_total=HW, thw=thw, cache_feats=cache_feats,
        mask_tail=(hw_padded != HW), apply_dtype=apply_dtype)

    # Park unused blocks on the tile already resident so no spurious DMA fires.
    if cache_feats:
        g_map = lambda n, p, t: (n, 0, jnp.where(p == 0, t, last))      # p0 only
        s_map = lambda n, p, t: (n, 0, jnp.where(p == 1, last, t))      # p0 & p2
    else:
        g_map = lambda n, p, t: (n, 0, jnp.where(p == 2, last, t))      # p0 & p1
        s_map = lambda n, p, t: (n, 0, t)                               # all
    w_map = lambda n, p, t: (0, 0)
    # Output only produced in phase 2; keep its block index parked at tile 0
    # during the stats phases so nothing is flushed early.
    o_map = lambda n, p, t: (n, 0, jnp.where(p == 2, t, 0))

    scratch = [
        pltpu.VMEM((F_int, 1), jnp.float32),         # W_g branch: sum
        pltpu.VMEM((F_int, 1), jnp.float32),         # W_g branch: sum of squares
        pltpu.VMEM((F_int, 1), jnp.float32),         # W_x branch: sum
        pltpu.VMEM((F_int, 1), jnp.float32),         # W_x branch: sum of squares
        pltpu.VMEM((1, 1), jnp.float32),             # psi: sum
        pltpu.VMEM((1, 1), jnp.float32),             # psi: sum of squares
        pltpu.VMEM((n_tiles, 1, thw), jnp.float32),  # psi_raw (whole sample)
    ]
    if cache_feats:
        scratch += [pltpu.VMEM((n_tiles, F_int, thw), feat_dtype),   # gf cache
                    pltpu.VMEM((n_tiles, F_int, thw), feat_dtype)]   # sf cache

    out = pl.pallas_call(
        kernel,
        out_shape=jax.ShapeDtypeStruct((N, F_l, hw_padded), out_dtype),
        grid_spec=pltpu.PrefetchScalarGridSpec(
            num_scalar_prefetch=0,
            grid=(N, 3, n_tiles),
            in_specs=[
                pl.BlockSpec((1, F_g, thw), g_map),
                pl.BlockSpec((1, F_l, thw), s_map),
                pl.BlockSpec((F_int, F_g), w_map),
                pl.BlockSpec((F_int, F_l), w_map),
                pl.BlockSpec((F_int, 1), w_map),
            ],
            out_specs=pl.BlockSpec((1, F_l, thw), o_map),
            scratch_shapes=scratch),
        compiler_params=pltpu.CompilerParams(
            dimension_semantics=("parallel", "arbitrary", "arbitrary"),
            vmem_limit_bytes=vmem_limit),
    )(g, s, wg, wx, wp_col)

    if hw_padded != HW:
        out = out[:, :, :HW]
    return out.reshape(N, F_l, H, W)


def _reference(g_nchw, skip_nchw, params):
    """Pure-JAX reference mirroring the PyTorch forward exactly (biases included)."""
    wg, bg, wx, bx, wp, bp = params

    def conv1x1(x, w, b):  # x: (N,Cin,H,W), w: (Cout,Cin), b: (Cout,)
        return jnp.einsum('oc,nchw->nohw', w, x) + b[None, :, None, None]

    def inorm(x):  # InstanceNorm2d, affine=False, biased variance over (H, W)
        mean = jnp.mean(x, axis=(2, 3), keepdims=True)
        var = jnp.mean((x - mean) ** 2, axis=(2, 3), keepdims=True)
        return (x - mean) / jnp.sqrt(var + EPS)

    g_feat = inorm(conv1x1(g_nchw, wg, bg))
    skip_feat = inorm(conv1x1(skip_nchw, wx, bx))
    mixed = jnp.maximum(g_feat + skip_feat, 0.0)
    atten = jax.nn.sigmoid(inorm(conv1x1(mixed, wp, bp)))
    return atten * skip_nchw


if __name__ == "__main__":
    N, F_g, F_l, F_int, H, W = 2, 4, 4, 8, 16, 16

    key = jax.random.PRNGKey(0)
    k = jax.random.split(key, 10)
    g_in = jax.random.normal(k[0], (N, F_g, H, W), jnp.float32)
    skip_in = jax.random.normal(k[1], (N, F_l, H, W), jnp.float32)

    # Parameters in PyTorch orientation (Cout, Cin) / (Cout,).
    wg = jax.random.normal(k[2], (F_int, F_g), jnp.float32) * 0.2
    bg = jax.random.normal(k[3], (F_int,), jnp.float32) * 0.1
    wx = jax.random.normal(k[4], (F_int, F_l), jnp.float32) * 0.2
    bx = jax.random.normal(k[5], (F_int,), jnp.float32) * 0.1
    wp = jax.random.normal(k[6], (1, F_int), jnp.float32) * 0.2
    bp = jax.random.normal(k[7], (1,), jnp.float32) * 0.1
    params = (wg, bg, wx, bx, wp, bp)

    ref = jax.block_until_ready(_reference(g_in, skip_in, params))

    # 1) Default bf16 I/O + MXU path (f32 stats inside): loose check.
    out_bf16 = jax.block_until_ready(skip_attention_block(g_in, skip_in, params))
    np.testing.assert_allclose(np.asarray(out_bf16.astype(jnp.float32)),
                               np.asarray(ref), rtol=0.0, atol=0.15)

    # 2) f32 path with the VMEM feature cache: tight check.
    out_f32 = jax.block_until_ready(
        skip_attention_block(g_in, skip_in, params, compute_dtype=jnp.float32))
    np.testing.assert_allclose(np.asarray(out_f32), np.asarray(ref),
                               rtol=1e-3, atol=1e-3)

    # 3) f32 recompute fallback (feature cache disabled): tight check.
    out_nc = jax.block_until_ready(
        skip_attention_block(g_in, skip_in, params, compute_dtype=jnp.float32,
                             use_feature_cache=False))
    np.testing.assert_allclose(np.asarray(out_nc), np.asarray(ref),
                               rtol=1e-3, atol=1e-3)

    # 4) HW not a multiple of 128 -> pad + psi-mask path.
    H2 = W2 = 10
    g2 = jax.random.normal(k[8], (N, F_g, H2, W2), jnp.float32)
    s2 = jax.random.normal(k[9], (N, F_l, H2, W2), jnp.float32)
    ref2 = jax.block_until_ready(_reference(g2, s2, params))
    out2 = jax.block_until_ready(
        skip_attention_block(g2, s2, params, compute_dtype=jnp.float32))
    np.testing.assert_allclose(np.asarray(out2), np.asarray(ref2),
                               rtol=1e-3, atol=1e-3)

    print("KERNEL_OK")
</pallas_src>

<mosaic_0001>
module attributes {stable_mosaic.version = 11 : i64} {
  func.func @_skip_attention_kernel(%arg0: i32, %arg1: i32, %arg2: i32, %arg3: memref<1x4x256xbf16, #tpu.memory_space<vmem>>, %arg4: memref<1x4x256xbf16, #tpu.memory_space<vmem>>, %arg5: memref<8x4xbf16, #tpu.memory_space<vmem>>, %arg6: memref<8x4xbf16, #tpu.memory_space<vmem>>, %arg7: memref<8x1xf32, #tpu.memory_space<vmem>>, %arg8: memref<1x4x256xbf16, #tpu.memory_space<vmem>>, %arg9: memref<8x1xf32, #tpu.memory_space<vmem>>, %arg10: memref<8x1xf32, #tpu.memory_space<vmem>>, %arg11: memref<8x1xf32, #tpu.memory_space<vmem>>, %arg12: memref<8x1xf32, #tpu.memory_space<vmem>>, %arg13: memref<1x1xf32, #tpu.memory_space<vmem>>, %arg14: memref<1x1xf32, #tpu.memory_space<vmem>>, %arg15: memref<1x1x256xf32, #tpu.memory_space<vmem>>, %arg16: memref<1x8x256xbf16, #tpu.memory_space<vmem>>, %arg17: memref<1x8x256xbf16, #tpu.memory_space<vmem>>) attributes {dimension_semantics = [#tpu.dimension_semantics<parallel>, #tpu.dimension_semantics<arbitrary>, #tpu.dimension_semantics<arbitrary>], iteration_bounds = array<i64: 2, 3, 1>, scalar_prefetch = 0 : i64, scratch_operands = 9 : i64, tpu.core_type = #tpu.core_type<tc>, window_params = [{transform_indices = @transform_0, window_bounds = array<i64: 1, 4, 256>}, {transform_indices = @transform_1, window_bounds = array<i64: 1, 4, 256>}, {pipeline_mode = #tpu.pipeline_mode<synchronous>, transform_indices = @transform_2, window_bounds = array<i64: 8, 4>}, {pipeline_mode = #tpu.pipeline_mode<synchronous>, transform_indices = @transform_3, window_bounds = array<i64: 8, 4>}, {pipeline_mode = #tpu.pipeline_mode<synchronous>, transform_indices = @transform_4, window_bounds = array<i64: 8, 1>}, {transform_indices = @transform_5, window_bounds = array<i64: 1, 4, 256>}]} {
    %c0_i32 = arith.constant 0 : i32
    %0 = arith.cmpi eq, %arg1, %c0_i32 : i32
    %c0_i32_0 = arith.constant 0 : i32
    %1 = arith.cmpi eq, %arg2, %c0_i32_0 : i32
    %2 = arith.andi %0, %1 : i1
    %3 = arith.extui %2 : i1 to i32
    %c0_i32_1 = arith.constant 0 : i32
    %4 = arith.cmpi ne, %3, %c0_i32_1 : i32
    scf.if %4 {
      %cst_7 = arith.constant 0.000000e+00 : f32
      %14 = vector.broadcast %cst_7 : f32 to vector<8x1xf32>
      %c0 = arith.constant 0 : index
      %c0_8 = arith.constant 0 : index
      %15 = vector.load %arg9[%c0, %c0_8] : memref<8x1xf32, #tpu.memory_space<vmem>>, vector<8x1xf32>
      tpu.vector_store %arg9[%c0, %c0_8], %14 {strides = array<i32>} : memref<8x1xf32, #tpu.memory_space<vmem>>, vector<8x1xf32>,
      %cst_9 = arith.constant 0.000000e+00 : f32
      %16 = vector.broadcast %cst_9 : f32 to vector<8x1xf32>
      %c0_10 = arith.constant 0 : index
      %c0_11 = arith.constant 0 : index
      %17 = vector.load %arg10[%c0_10, %c0_11] : memref<8x1xf32, #tpu.memory_space<vmem>>, vector<8x1xf32>
      tpu.vector_store %arg10[%c0_10, %c0_11], %16 {strides = array<i32>} : memref<8x1xf32, #tpu.memory_space<vmem>>, vector<8x1xf32>,
      %cst_12 = arith.constant 0.000000e+00 : f32
      %18 = vector.broadcast %cst_12 : f32 to vector<8x1xf32>
      %c0_13 = arith.constant 0 : index
      %c0_14 = arith.constant 0 : index
      %19 = vector.load %arg11[%c0_13, %c0_14] : memref<8x1xf32, #tpu.memory_space<vmem>>, vector<8x1xf32>
      tpu.vector_store %arg11[%c0_13, %c0_14], %18 {strides = array<i32>} : memref<8x1xf32, #tpu.memory_space<vmem>>, vector<8x1xf32>,
      %cst_15 = arith.constant 0.000000e+00 : f32
      %20 = vector.broadcast %cst_15 : f32 to vector<8x1xf32>
      %c0_16 = arith.constant 0 : index
      %c0_17 = arith.constant 0 : index
      %21 = vector.load %arg12[%c0_16, %c0_17] : memref<8x1xf32, #tpu.memory_space<vmem>>, vector<8x1xf32>
      tpu.vector_store %arg12[%c0_16, %c0_17], %20 {strides = array<i32>} : memref<8x1xf32, #tpu.memory_space<vmem>>, vector<8x1xf32>,
      %cst_18 = arith.constant 0.000000e+00 : f32
      %22 = vector.broadcast %cst_18 : f32 to vector<1x1xf32>
      %c0_19 = arith.constant 0 : index
      %c0_20 = arith.constant 0 : index
      %23 = vector.load %arg13[%c0_19, %c0_20] : memref<1x1xf32, #tpu.memory_space<vmem>>, vector<1x1xf32>
      tpu.vector_store %arg13[%c0_19, %c0_20], %22 {strides = array<i32>} : memref<1x1xf32, #tpu.memory_space<vmem>>, vector<1x1xf32>,
      %cst_21 = arith.constant 0.000000e+00 : f32
      %24 = vector.broadcast %cst_21 : f32 to vector<1x1xf32>
      %c0_22 = arith.constant 0 : index
      %c0_23 = arith.constant 0 : index
      %25 = vector.load %arg14[%c0_22, %c0_23] : memref<1x1xf32, #tpu.memory_space<vmem>>, vector<1x1xf32>
      tpu.vector_store %arg14[%c0_22, %c0_23], %24 {strides = array<i32>} : memref<1x1xf32, #tpu.memory_space<vmem>>, vector<1x1xf32>,
    } else {
    }
    %c0_i32_2 = arith.constant 0 : i32
    %5 = arith.cmpi eq, %arg1, %c0_i32_2 : i32
    %6 = arith.extui %5 : i1 to i32
    %c0_i32_3 = arith.constant 0 : i32
    %7 = arith.cmpi ne, %6, %c0_i32_3 : i32
    scf.if %7 {
      %c0 = arith.constant 0 : index
      %c0_7 = arith.constant 0 : index
      %14 = vector.load %arg5[%c0, %c0_7] : memref<8x4xbf16, #tpu.memory_space<vmem>>, vector<8x4xbf16>
      %c0_8 = arith.constant 0 : index
      %c0_9 = arith.constant 0 : index
      %c0_10 = arith.constant 0 : index
      %15 = vector.load %arg3[%c0_8, %c0_9, %c0_10] : memref<1x4x256xbf16, #tpu.memory_space<vmem>>, vector<1x4x256xbf16>
      %16 = vector.shape_cast %15 : vector<1x4x256xbf16> to vector<4x256xbf16>
      %cst_11 = arith.constant dense<0.000000e+00> : vector<8x256xf32>
      %17 = tpu.matmul %14, %16, %cst_11 {dimension_numbers = #tpu.dot_dimension_numbers<[1], [0], [0], [1], [0, 0, 1, 1], [], []>} : vector<8x4xbf16>, vector<4x256xbf16>, vector<8x256xf32> -> vector<8x256xf32>
      %c0_12 = arith.constant 0 : index
      %c0_13 = arith.constant 0 : index
      %18 = vector.load %arg6[%c0_12, %c0_13] : memref<8x4xbf16, #tpu.memory_space<vmem>>, vector<8x4xbf16>
      %c0_14 = arith.constant 0 : index
      %c0_15 = arith.constant 0 : index
      %c0_16 = arith.constant 0 : index
      %19 = vector.load %arg4[%c0_14, %c0_15, %c0_16] : memref<1x4x256xbf16, #tpu.memory_space<vmem>>, vector<1x4x256xbf16>
      %20 = vector.shape_cast %19 : vector<1x4x256xbf16> to vector<4x256xbf16>
      %cst_17 = arith.constant dense<0.000000e+00> : vector<8x256xf32>
      %21 = tpu.matmul %18, %20, %cst_17 {dimension_numbers = #tpu.dot_dimension_numbers<[1], [0], [0], [1], [0, 0, 1, 1], [], []>} : vector<8x4xbf16>, vector<4x256xbf16>, vector<8x256xf32> -> vector<8x256xf32>
      %22 = arith.truncf %17 : vector<8x256xf32> to vector<8x256xbf16>
      %23 = arith.index_cast %arg2 : i32 to index
      %c0_18 = arith.constant 0 : index
      %c0_19 = arith.constant 0 : index
      %24 = vector.load %arg16[%23, %c0_18, %c0_19] : memref<1x8x256xbf16, #tpu.memory_space<vmem>>, vector<1x8x256xbf16>
      %25 = vector.shape_cast %24 : vector<1x8x256xbf16> to vector<8x256xbf16>
      %26 = vector.shape_cast %22 : vector<8x256xbf16> to vector<1x8x256xbf16>
      tpu.vector_store %arg16[%23, %c0_18, %c0_19], %26 {strides = array<i32>} : memref<1x8x256xbf16, #tpu.memory_space<vmem>>, vector<1x8x256xbf16>,
      %27 = arith.truncf %21 : vector<8x256xf32> to vector<8x256xbf16>
      %28 = arith.index_cast %arg2 : i32 to index
      %c0_20 = arith.constant 0 : index
      %c0_21 = arith.constant 0 : index
      %29 = vector.load %arg17[%28, %c0_20, %c0_21] : memref<1x8x256xbf16, #tpu.memory_space<vmem>>, vector<1x8x256xbf16>
      %30 = vector.shape_cast %29 : vector<1x8x256xbf16> to vector<8x256xbf16>
      %31 = vector.shape_cast %27 : vector<8x256xbf16> to vector<1x8x256xbf16>
      tpu.vector_store %arg17[%28, %c0_20, %c0_21], %31 {strides = array<i32>} : memref<1x8x256xbf16, #tpu.memory_space<vmem>>, vector<1x8x256xbf16>,
      %c0_22 = arith.constant 0 : index
      %c0_23 = arith.constant 0 : index
      %32 = vector.load %arg9[%c0_22, %c0_23] : memref<8x1xf32, #tpu.memory_space<vmem>>, vector<8x1xf32>
      %cst_24 = arith.constant dense<0.000000e+00> : vector<8xf32>
      %33 = vector.multi_reduction <add>, %17, %cst_24 [1] : vector<8x256xf32> to vector<8xf32>
      %34 = vector.shape_cast %33 : vector<8xf32> to vector<8x1xf32>
      %35 = arith.addf %32, %34 : vector<8x1xf32>
      %c0_25 = arith.constant 0 : index
      %c0_26 = arith.constant 0 : index
      %36 = vector.load %arg9[%c0_25, %c0_26] : memref<8x1xf32, #tpu.memory_space<vmem>>, vector<8x1xf32>
      tpu.vector_store %arg9[%c0_25, %c0_26], %35 {strides = array<i32>} : memref<8x1xf32, #tpu.memory_space<vmem>>, vector<8x1xf32>,
      %c0_27 = arith.constant 0 : index
      %c0_28 = arith.constant 0 : index
      %37 = vector.load %arg10[%c0_27, %c0_28] : memref<8x1xf32, #tpu.memory_space<vmem>>, vector<8x1xf32>
      %38 = arith.mulf %17, %17 : vector<8x256xf32>
      %cst_29 = arith.constant dense<0.000000e+00> : vector<8xf32>
      %39 = vector.multi_reduction <add>, %38, %cst_29 [1] : vector<8x256xf32> to vector<8xf32>
      %40 = vector.shape_cast %39 : vector<8xf32> to vector<8x1xf32>
      %41 = arith.addf %37, %40 : vector<8x1xf32>
      %c0_30 = arith.constant 0 : index
      %c0_31 = arith.constant 0 : index
      %42 = vector.load %arg10[%c0_30, %c0_31] : memref<8x1xf32, #tpu.memory_space<vmem>>, vector<8x1xf32>
      tpu.vector_store %arg10[%c0_30, %c0_31], %41 {strides = array<i32>} : memref<8x1xf32, #tpu.memory_space<vmem>>, vector<8x1xf32>,
      %c0_32 = arith.constant 0 : index
      %c0_33 = arith.constant 0 : index
      %43 = vector.load %arg11[%c0_32, %c0_33] : memref<8x1xf32, #tpu.memory_space<vmem>>, vector<8x1xf32>
      %cst_34 = arith.constant dense<0.000000e+00> : vector<8xf32>
      %44 = vector.multi_reduction <add>, %21, %cst_34 [1] : vector<8x256xf32> to vector<8xf32>
      %45 = vector.shape_cast %44 : vector<8xf32> to vector<8x1xf32>
      %46 = arith.addf %43, %45 : vector<8x1xf32>
      %c0_35 = arith.constant 0 : index
      %c0_36 = arith.constant 0 : index
      %47 = vector.load %arg11[%c0_35, %c0_36] : memref<8x1xf32, #tpu.memory_space<vmem>>, vector<8x1xf32>
      tpu.vector_store %arg11[%c0_35, %c0_36], %46 {strides = array<i32>} : memref<8x1xf32, #tpu.memory_space<vmem>>, vector<8x1xf32>,
      %c0_37 = arith.constant 0 : index
      %c0_38 = arith.constant 0 : index
      %48 = vector.load %arg12[%c0_37, %c0_38] : memref<8x1xf32, #tpu.memory_space<vmem>>, vector<8x1xf32>
      %49 = arith.mulf %21, %21 : vector<8x256xf32>
      %cst_39 = arith.constant dense<0.000000e+00> : vector<8xf32>
      %50 = vector.multi_reduction <add>, %49, %cst_39 [1] : vector<8x256xf32> to vector<8xf32>
      %51 = vector.shape_cast %50 : vector<8xf32> to vector<8x1xf32>
      %52 = arith.addf %48, %51 : vector<8x1xf32>
      %c0_40 = arith.constant 0 : index
      %c0_41 = arith.constant 0 : index
      %53 = vector.load %arg12[%c0_40, %c0_41] : memref<8x1xf32, #tpu.memory_space<vmem>>, vector<8x1xf32>
      tpu.vector_store %arg12[%c0_40, %c0_41], %52 {strides = array<i32>} : memref<8x1xf32, #tpu.memory_space<vmem>>, vector<8x1xf32>,
    } else {
    }
    %c1_i32 = arith.constant 1 : i32
    %8 = arith.cmpi eq, %arg1, %c1_i32 : i32
    %9 = arith.extui %8 : i1 to i32
    %cst = arith.constant 3.906250e-03 : f32
    %c0_i32_4 = arith.constant 0 : i32
    %10 = arith.cmpi ne, %9, %c0_i32_4 : i32
    scf.if %10 {
      %14 = arith.index_cast %arg2 : i32 to index
      %c0 = arith.constant 0 : index
      %c0_7 = arith.constant 0 : index
      %15 = vector.load %arg16[%14, %c0, %c0_7] : memref<1x8x256xbf16, #tpu.memory_space<vmem>>, vector<1x8x256xbf16>
      %16 = vector.shape_cast %15 : vector<1x8x256xbf16> to vector<8x256xbf16>
      %17 = arith.extf %16 : vector<8x256xbf16> to vector<8x256xf32>
      %18 = arith.index_cast %arg2 : i32 to index
      %c0_8 = arith.constant 0 : index
      %c0_9 = arith.constant 0 : index
      %19 = vector.load %arg17[%18, %c0_8, %c0_9] : memref<1x8x256xbf16, #tpu.memory_space<vmem>>, vector<1x8x256xbf16>
      %20 = vector.shape_cast %19 : vector<1x8x256xbf16> to vector<8x256xbf16>
      %21 = arith.extf %20 : vector<8x256xbf16> to vector<8x256xf32>
      %c0_10 = arith.constant 0 : index
      %c0_11 = arith.constant 0 : index
      %22 = vector.load %arg9[%c0_10, %c0_11] : memref<8x1xf32, #tpu.memory_space<vmem>>, vector<8x1xf32>
      %23 = vector.broadcast %cst : f32 to vector<8x1xf32>
      %24 = arith.mulf %22, %23 : vector<8x1xf32>
      %c0_12 = arith.constant 0 : index
      %c0_13 = arith.constant 0 : index
      %25 = vector.load %arg10[%c0_12, %c0_13] : memref<8x1xf32, #tpu.memory_space<vmem>>, vector<8x1xf32>
      %26 = vector.broadcast %cst : f32 to vector<8x1xf32>
      %27 = arith.mulf %25, %26 : vector<8x1xf32>
      %28 = arith.mulf %24, %24 : vector<8x1xf32>
      %29 = arith.subf %27, %28 : vector<8x1xf32>
      %cst_14 = arith.constant 0.000000e+00 : f32
      %30 = vector.broadcast %cst_14 : f32 to vector<8x1xf32>
      %31 = arith.maximumf %29, %30 : vector<8x1xf32>
      %c0_15 = arith.constant 0 : index
      %c0_16 = arith.constant 0 : index
      %32 = vector.load %arg11[%c0_15, %c0_16] : memref<8x1xf32, #tpu.memory_space<vmem>>, vector<8x1xf32>
      %33 = vector.broadcast %cst : f32 to vector<8x1xf32>
      %34 = arith.mulf %32, %33 : vector<8x1xf32>
      %c0_17 = arith.constant 0 : index
      %c0_18 = arith.constant 0 : index
      %35 = vector.load %arg12[%c0_17, %c0_18] : memref<8x1xf32, #tpu.memory_space<vmem>>, vector<8x1xf32>
      %36 = vector.broadcast %cst : f32 to vector<8x1xf32>
      %37 = arith.mulf %35, %36 : vector<8x1xf32>
      %38 = arith.mulf %34, %34 : vector<8x1xf32>
      %39 = arith.subf %37, %38 : vector<8x1xf32>
      %cst_19 = arith.constant 0.000000e+00 : f32
      %40 = vector.broadcast %cst_19 : f32 to vector<8x1xf32>
      %41 = arith.maximumf %39, %40 : vector<8x1xf32>
      %42 = vector.broadcast %24 : vector<8x1xf32> to vector<8x256xf32>
      %43 = arith.subf %17, %42 : vector<8x256xf32>
      %cst_20 = arith.constant 9.99999974E-6 : f32
      %44 = vector.broadcast %cst_20 : f32 to vector<8x1xf32>
      %45 = arith.addf %31, %44 : vector<8x1xf32>
      %46 = math.rsqrt %45 : vector<8x1xf32>
      %47 = vector.broadcast %46 : vector<8x1xf32> to vector<8x256xf32>
      %48 = arith.mulf %43, %47 : vector<8x256xf32>
      %49 = vector.broadcast %34 : vector<8x1xf32> to vector<8x256xf32>
      %50 = arith.subf %21, %49 : vector<8x256xf32>
      %cst_21 = arith.constant 9.99999974E-6 : f32
      %51 = vector.broadcast %cst_21 : f32 to vector<8x1xf32>
      %52 = arith.addf %41, %51 : vector<8x1xf32>
      %53 = math.rsqrt %52 : vector<8x1xf32>
      %54 = vector.broadcast %53 : vector<8x1xf32> to vector<8x256xf32>
      %55 = arith.mulf %50, %54 : vector<8x256xf32>
      %56 = arith.addf %48, %55 : vector<8x256xf32>
      %cst_22 = arith.constant 0.000000e+00 : f32
      %57 = vector.broadcast %cst_22 : f32 to vector<8x256xf32>
      %58 = arith.maximumf %56, %57 : vector<8x256xf32>
      %c0_23 = arith.constant 0 : index
      %c0_24 = arith.constant 0 : index
      %59 = vector.load %arg7[%c0_23, %c0_24] : memref<8x1xf32, #tpu.memory_space<vmem>>, vector<8x1xf32>
      %60 = vector.broadcast %59 : vector<8x1xf32> to vector<8x256xf32>
      %61 = arith.mulf %60, %58 : vector<8x256xf32>
      %cst_25 = arith.constant dense<0.000000e+00> : vector<256xf32>
      %62 = vector.multi_reduction <add>, %61, %cst_25 [0] : vector<8x256xf32> to vector<256xf32>
      %63 = vector.shape_cast %62 : vector<256xf32> to vector<1x256xf32>
      %64 = arith.index_cast %arg2 : i32 to index
      %c0_26 = arith.constant 0 : index
      %c0_27 = arith.constant 0 : index
      %65 = vector.load %arg15[%64, %c0_26, %c0_27] : memref<1x1x256xf32, #tpu.memory_space<vmem>>, vector<1x1x256xf32>
      %66 = vector.shape_cast %65 : vector<1x1x256xf32> to vector<1x256xf32>
      %67 = vector.shape_cast %63 : vector<1x256xf32> to vector<1x1x256xf32>
      tpu.vector_store %arg15[%64, %c0_26, %c0_27], %67 {strides = array<i32>} : memref<1x1x256xf32, #tpu.memory_space<vmem>>, vector<1x1x256xf32>,
      %c0_28 = arith.constant 0 : index
      %c0_29 = arith.constant 0 : index
      %68 = vector.load %arg13[%c0_28, %c0_29] : memref<1x1xf32, #tpu.memory_space<vmem>>, vector<1x1xf32>
      %cst_30 = arith.constant dense<0.000000e+00> : vector<1xf32>
      %69 = vector.multi_reduction <add>, %63, %cst_30 [1] : vector<1x256xf32> to vector<1xf32>
      %70 = vector.shape_cast %69 : vector<1xf32> to vector<1x1xf32>
      %71 = arith.addf %68, %70 : vector<1x1xf32>
      %c0_31 = arith.constant 0 : index
      %c0_32 = arith.constant 0 : index
      %72 = vector.load %arg13[%c0_31, %c0_32] : memref<1x1xf32, #tpu.memory_space<vmem>>, vector<1x1xf32>
      tpu.vector_store %arg13[%c0_31, %c0_32], %71 {strides = array<i32>} : memref<1x1xf32, #tpu.memory_space<vmem>>, vector<1x1xf32>,
      %c0_33 = arith.constant 0 : index
      %c0_34 = arith.constant 0 : index
      %73 = vector.load %arg14[%c0_33, %c0_34] : memref<1x1xf32, #tpu.memory_space<vmem>>, vector<1x1xf32>
      %74 = arith.mulf %63, %63 : vector<1x256xf32>
      %cst_35 = arith.constant dense<0.000000e+00> : vector<1xf32>
      %75 = vector.multi_reduction <add>, %74, %cst_35 [1] : vector<1x256xf32> to vector<1xf32>
      %76 = vector.shape_cast %75 : vector<1xf32> to vector<1x1xf32>
      %77 = arith.addf %73, %76 : vector<1x1xf32>
      %c0_36 = arith.constant 0 : index
      %c0_37 = arith.constant 0 : index
      %78 = vector.load %arg14[%c0_36, %c0_37] : memref<1x1xf32, #tpu.memory_space<vmem>>, vector<1x1xf32>
      tpu.vector_store %arg14[%c0_36, %c0_37], %77 {strides = array<i32>} : memref<1x1xf32, #tpu.memory_space<vmem>>, vector<1x1xf32>,
    } else {
    }
    %c2_i32 = arith.constant 2 : i32
    %11 = arith.cmpi eq, %arg1, %c2_i32 : i32
    %12 = arith.extui %11 : i1 to i32
    %cst_5 = arith.constant 3.906250e-03 : f32
    %c0_i32_6 = arith.constant 0 : i32
    %13 = arith.cmpi ne, %12, %c0_i32_6 : i32
    scf.if %13 {
      %c0 = arith.constant 0 : index
      %c0_7 = arith.constant 0 : index
      %14 = vector.load %arg13[%c0, %c0_7] : memref<1x1xf32, #tpu.memory_space<vmem>>, vector<1x1xf32>
      %15 = vector.broadcast %cst_5 : f32 to vector<1x1xf32>
      %16 = arith.mulf %14, %15 : vector<1x1xf32>
      %c0_8 = arith.constant 0 : index
      %c0_9 = arith.constant 0 : index
      %17 = vector.load %arg14[%c0_8, %c0_9] : memref<1x1xf32, #tpu.memory_space<vmem>>, vector<1x1xf32>
      %18 = vector.broadcast %cst_5 : f32 to vector<1x1xf32>
      %19 = arith.mulf %17, %18 : vector<1x1xf32>
      %20 = arith.mulf %16, %16 : vector<1x1xf32>
      %21 = arith.subf %19, %20 : vector<1x1xf32>
      %cst_10 = arith.constant 0.000000e+00 : f32
      %22 = vector.broadcast %cst_10 : f32 to vector<1x1xf32>
      %23 = arith.maximumf %21, %22 : vector<1x1xf32>
      %24 = arith.index_cast %arg2 : i32 to index
      %c0_11 = arith.constant 0 : index
      %c0_12 = arith.constant 0 : index
      %25 = vector.load %arg15[%24, %c0_11, %c0_12] : memref<1x1x256xf32, #tpu.memory_space<vmem>>, vector<1x1x256xf32>
      %26 = vector.shape_cast %25 : vector<1x1x256xf32> to vector<1x256xf32>
      %27 = vector.broadcast %16 : vector<1x1xf32> to vector<1x256xf32>
      %28 = arith.subf %26, %27 : vector<1x256xf32>
      %cst_13 = arith.constant 9.99999974E-6 : f32
      %29 = vector.broadcast %cst_13 : f32 to vector<1x1xf32>
      %30 = arith.addf %23, %29 : vector<1x1xf32>
      %31 = math.rsqrt %30 : vector<1x1xf32>
      %32 = vector.broadcast %31 : vector<1x1xf32> to vector<1x256xf32>
      %33 = arith.mulf %28, %32 : vector<1x256xf32>
      %cst_14 = arith.constant -6.000000e+01 : f32
      %34 = vector.broadcast %cst_14 : f32 to vector<1x256xf32>
      %35 = arith.maximumf %33, %34 : vector<1x256xf32>
      %cst_15 = arith.constant 0.000000e+00 : f32
      %36 = vector.broadcast %cst_15 : f32 to vector<1x256xf32>
      %37 = arith.subf %36, %35 : vector<1x256xf32>
      %38 = math.exp %37 : vector<1x256xf32>
      %cst_16 = arith.constant 1.000000e+00 : f32
      %39 = vector.broadcast %cst_16 : f32 to vector<1x256xf32>
      %40 = arith.addf %39, %38 : vector<1x256xf32>
      %41 = tpu.reciprocal %40 {approx = true} : vector<1x256xf32> -> vector<1x256xf32>
      %42 = arith.mulf %40, %41 : vector<1x256xf32>
      %cst_17 = arith.constant 2.000000e+00 : f32
      %43 = vector.broadcast %cst_17 : f32 to vector<1x256xf32>
      %44 = arith.subf %43, %42 : vector<1x256xf32>
      %45 = arith.mulf %41, %44 : vector<1x256xf32>
      %46 = arith.truncf %45 : vector<1x256xf32> to vector<1x256xbf16>
      %c0_18 = arith.constant 0 : index
      %c0_19 = arith.constant 0 : index
      %c0_20 = arith.constant 0 : index
      %47 = vector.load %arg4[%c0_18, %c0_19, %c0_20] : memref<1x4x256xbf16, #tpu.memory_space<vmem>>, vector<1x4x256xbf16>
      %48 = vector.shape_cast %47 : vector<1x4x256xbf16> to vector<4x256xbf16>
      %49 = vector.broadcast %46 : vector<1x256xbf16> to vector<4x256xbf16>
      %50 = arith.mulf %49, %48 : vector<4x256xbf16>
      %c0_21 = arith.constant 0 : index
      %c0_22 = arith.constant 0 : index
      %c0_23 = arith.constant 0 : index
      %51 = vector.load %arg8[%c0_21, %c0_22, %c0_23] : memref<1x4x256xbf16, #tpu.memory_space<vmem>>, vector<1x4x256xbf16>
      %52 = vector.shape_cast %51 : vector<1x4x256xbf16> to vector<4x256xbf16>
      %53 = vector.shape_cast %50 : vector<4x256xbf16> to vector<1x4x256xbf16>
      tpu.vector_store %arg8[%c0_21, %c0_22, %c0_23], %53 {strides = array<i32>} : memref<1x4x256xbf16, #tpu.memory_space<vmem>>, vector<1x4x256xbf16>,
    } else {
    }
    return
  }
  func.func @transform_0(%arg0: i32, %arg1: i32, %arg2: i32) -> (i32, i32, i32) {
    %c0_i32 = arith.constant 0 : i32
    %0 = arith.cmpi eq, %arg1, %c0_i32 : i32
    %c0_i32_0 = arith.constant 0 : i32
    %1 = arith.select %0, %arg2, %c0_i32_0 : i32
    %c0_i32_1 = arith.constant 0 : i32
    %c0_i32_2 = arith.constant 0 : i32
    return %arg0, %c0_i32_1, %1 : i32, i32, i32
  }
  func.func @transform_1(%arg0: i32, %arg1: i32, %arg2: i32) -> (i32, i32, i32) {
    %c1_i32 = arith.constant 1 : i32
    %0 = arith.cmpi eq, %arg1, %c1_i32 : i32
    %c0_i32 = arith.constant 0 : i32
    %1 = arith.select %0, %c0_i32, %arg2 : i32
    %c0_i32_0 = arith.constant 0 : i32
    %c0_i32_1 = arith.constant 0 : i32
    return %arg0, %c0_i32_0, %1 : i32, i32, i32
  }
  func.func @transform_2(%arg0: i32, %arg1: i32, %arg2: i32) -> (i32, i32) {
    %c0_i32 = arith.constant 0 : i32
    %c0_i32_0 = arith.constant 0 : i32
    %c0_i32_1 = arith.constant 0 : i32
    return %c0_i32, %c0_i32_0 : i32, i32
  }
  func.func @transform_3(%arg0: i32, %arg1: i32, %arg2: i32) -> (i32, i32) {
    %c0_i32 = arith.constant 0 : i32
    %c0_i32_0 = arith.constant 0 : i32
    %c0_i32_1 = arith.constant 0 : i32
    return %c0_i32, %c0_i32_0 : i32, i32
  }
  func.func @transform_4(%arg0: i32, %arg1: i32, %arg2: i32) -> (i32, i32) {
    %c0_i32 = arith.constant 0 : i32
    %c0_i32_0 = arith.constant 0 : i32
    %c0_i32_1 = arith.constant 0 : i32
    return %c0_i32, %c0_i32_0 : i32, i32
  }
  func.func @transform_5(%arg0: i32, %arg1: i32, %arg2: i32) -> (i32, i32, i32) {
    %c2_i32 = arith.constant 2 : i32
    %0 = arith.cmpi eq, %arg1, %c2_i32 : i32
    %c0_i32 = arith.constant 0 : i32
    %1 = arith.select %0, %arg2, %c0_i32 : i32
    %c0_i32_0 = arith.constant 0 : i32
    %c0_i32_1 = arith.constant 0 : i32
    return %arg0, %c0_i32_0, %1 : i32, i32, i32
  }
}

</mosaic_0001>

<llo_original>
// kernel: tpu_custom_call.1
$region0: #{tpu_custom_call.1}
  #allocation0 [shape = 'u32[]', space=smem, size = 0x4, offset = 0x4, fixed_abs, tag = 'smem constant byte address 0x4 - core index']
  #allocation1 [shape = 'u32[144,128]{1,0:T(1,128)}', space=vmem, size = 0x12000, scoped, tag = 'internal scratch']
  #allocation2 [shape = 'f32[8,1]{1,0:T(8,128)}', space=vmem, size = 0x1000, scoped, tag = 'scratch operand']
  #allocation3 [shape = 'f32[8,1]{1,0:T(8,128)}', space=vmem, size = 0x1000, scoped, tag = 'scratch operand']
  #allocation4 [shape = 'f32[8,1]{1,0:T(8,128)}', space=vmem, size = 0x1000, scoped, tag = 'scratch operand']
  #allocation5 [shape = 'f32[8,1]{1,0:T(8,128)}', space=vmem, size = 0x1000, scoped, tag = 'scratch operand']
  #allocation6 [shape = 'f32[1,1]{1,0:T(1,128)}', space=vmem, size = 0x200, scoped, tag = 'scratch operand']
  #allocation7 [shape = 'f32[1,1]{1,0:T(1,128)}', space=vmem, size = 0x200, scoped, tag = 'scratch operand']
  #allocation8 [shape = 'f32[1,1,256]{2,1,0:T(1,128)}', space=vmem, size = 0x400, scoped, tag = 'scratch operand']
  #allocation9 [shape = 'bf16[1,8,256]{2,1,0:T(8,128)(2,1)}', space=vmem, size = 0x1000, scoped, tag = 'scratch operand']
  #allocation10 [shape = 'bf16[1,8,256]{2,1,0:T(8,128)(2,1)}', space=vmem, size = 0x1000, scoped, tag = 'scratch operand']
  %s0 = inlined_call_operand.vmem [shape: bf16[2,4,256], index: 0, kind: input, shape index: {}]
  %s1 = inlined_call_operand.vmem [shape: bf16[2,4,256], index: 1, kind: input, shape index: {}]
  %s2 = inlined_call_operand.vmem [shape: bf16[8,4], index: 2, kind: input, shape index: {}]
  %s3 = inlined_call_operand.vmem [shape: bf16[8,4], index: 3, kind: input, shape index: {}]
  %s4 = inlined_call_operand.vmem [shape: f32[8,1], index: 4, kind: input, shape index: {}]
  %s5 = inlined_call_operand.hbm [shape: bf16[2,4,256], index: 5, kind: output, shape index: {}]
  %s6 = sld [smem:[#allocation0]]
  $region69: #{tpu_custom_call.1} parent=0
    _
  %s8 = ssub.s32 1, %s6
  %s9 = scalar_select 0, %s8, %s6
  $region1: #{tpu_custom_call.1} parent=0
    #allocation11 [shape = 'u8[4096]{0}', space=vmem, size = 0x1000, scoped, tag = 'output window, operand 0']
    #allocation12 [shape = 's32[2]{0}', space=sflag, size = 0x8, scoped, tag = 'scoped memory for tpu_custom_call.1']
    %10 = vsyncpa [#allocation12], 0
    %s11 = scalar_lea.sflag [#allocation12], 1
    %12 = vsyncpa %s11, 0
    loop: start=0, step=1, limit=8
    $region2: #{tpu_custom_call.1} parent=1 // loop_pre_header
      _
    $region3: #{tpu_custom_call.1} parent=1 // loop_header
      %s14 = sphi 0, %s18
      %p15 = scmp.ge.s32.totalorder %s14, 8
      %s21 = sphi 0, %s40
      %s22 = sphi 0, %s36
      %s23 = sphi 0, %s32
      %s24 = sphi 0, %s21
      %s25 = sphi 0, %s22
      %s26 = sphi 0, %s23
      %s27 = sphi 0, %s24
      %s28 = sphi 0, %s25
      %s29 = sphi 0, %s26
      %s49 = sphi 0, %s51
      %s52 = sphi 0, %s49
      %s53 = sphi 0, %s52
      %s69 = sphi 0, %s53
      %s81 = sphi 0, %s83
      %s84 = sphi 0, %s81
      %s85 = sphi 0, %s84
      %s101 = sphi 0, %s85
      %s105 = sphi 0, %s105
      %s107 = sphi 0, %s105
      %s108 = sphi 0, %s107
      %s122 = sphi 0, %s108
      %s126 = sphi 0, %s126
      %s128 = sphi 0, %s126
      %s129 = sphi 0, %s128
      %s143 = sphi 0, %s129
      %s147 = sphi 0, %s147
      %s149 = sphi 0, %s147
      %s150 = sphi 0, %s149
      %s164 = sphi 0, %s150
      %s176 = sphi 0, %s178
      %s179 = sphi 0, %s176
      %s180 = sphi 0, %s179
      %s196 = sphi 0, %s180
    $region4: #{tpu_custom_call.1} parent=1 // loop_header_branch
      %17 = sbr.rel (%p15) target = $region8
    $region5: #{tpu_custom_call.1} parent=1 // loop_body
      %s19 = ssub.s32 %s14, 1
      %s20 = ssub.s32 %s14, 2
      %s30 = sadd.s32 1, %s23
      %p31 = scmp.ge.s32.totalorder %s30, 1
      %s32 = scalar_select %p31, 0, %s30
      %s33 = sadd.s32 1, %s22
      %s34 = scalar_select %p31, %s33, %s22
      %p35 = scmp.ge.s32.totalorder %s34, 3
      %s36 = scalar_select %p35, 0, %s34
      %s37 = sadd.s32 1, %s21
      %s38 = scalar_select %p35, %s37, %s21
      %p39 = scmp.ge.s32.totalorder %s38, 2
      %s40 = scalar_select %p39, 0, %s38
      %p41 = scmp.eq.s32.totalorder %s22, 0
      %s42 = scalar_select %p41, %s23, 0
      %p43 = scmp.eq.s32.totalorder %s36, 0
      %s44 = scalar_select %p43, %s32, 0
      %s45 = ssub.s32 %s21, %s40
      %s46 = ssub.s32 %s42, %s44
      %s47 = sor.u32 %s45, %s46
      %p48 = scmp.eq.s32.totalorder %s47, 0
      %s50 = sadd.s32 %s49, 1
      %s51 = scalar_select %p48, %s49, %s50
      %p54 = pneg %p48
      %p55 = scmp.eq.s32.totalorder %s14, 5
      %p56 = por %p54, %p55
      %p57 = scmp.ne.s32.totalorder %s49, %s52
      %p58 = scmp.eq.s32.totalorder %s14, 0
      %p59 = por %p57, %p58
      %p60 = scmp.ne.s32.totalorder %s49, %s52
      %p61 = scmp.eq.s32.totalorder %s19, 5
      %p62 = por %p60, %p61
      %p63 = scmp.ne.s32.totalorder %s52, %s53
      %p64 = scmp.eq.s32.totalorder %s19, 0
      %p65 = por %p63, %p64
      %p66 = scmp.ne.s32.totalorder %s52, %s53
      %p67 = scmp.eq.s32.totalorder %s20, 5
      %p68 = por %p66, %p67
      %p70 = scmp.ne.s32.totalorder %s53, %s69
      %p71 = scmp.eq.s32.totalorder %s20, 0
      %p72 = por %p70, %p71
      %p73 = scmp.eq.s32.totalorder %s22, 1
      %s74 = scalar_select %p73, 0, %s23
      %p75 = scmp.eq.s32.totalorder %s36, 1
      %s76 = scalar_select %p75, 0, %s32
      %s77 = ssub.s32 %s21, %s40
      %s78 = ssub.s32 %s74, %s76
      %s79 = sor.u32 %s77, %s78
      %p80 = scmp.eq.s32.totalorder %s79, 0
      %s82 = sadd.s32 %s81, 1
      %s83 = scalar_select %p80, %s81, %s82
      %p86 = pneg %p80
      %p87 = scmp.eq.s32.totalorder %s14, 5
      %p88 = por %p86, %p87
      %p89 = scmp.ne.s32.totalorder %s81, %s84
      %p90 = scmp.eq.s32.totalorder %s14, 0
      %p91 = por %p89, %p90
      %p92 = scmp.ne.s32.totalorder %s81, %s84
      %p93 = scmp.eq.s32.totalorder %s19, 5
      %p94 = por %p92, %p93
      %p95 = scmp.ne.s32.totalorder %s84, %s85
      %p96 = scmp.eq.s32.totalorder %s19, 0
      %p97 = por %p95, %p96
      %p98 = scmp.ne.s32.totalorder %s84, %s85
      %p99 = scmp.eq.s32.totalorder %s20, 5
      %p100 = por %p98, %p99
      %p102 = scmp.ne.s32.totalorder %s85, %s101
      %p103 = scmp.eq.s32.totalorder %s20, 0
      %p104 = por %p102, %p103
      %s106 = sadd.s32 %s105, 1
      %p109 = scmp.eq.s32.totalorder %s14, 5
      %p110 = scmp.ne.s32.totalorder %s105, %s107
      %p111 = scmp.eq.s32.totalorder %s14, 0
      %p112 = por %p110, %p111
      %p113 = scmp.ne.s32.totalorder %s105, %s107
      %p114 = scmp.eq.s32.totalorder %s19, 5
      %p115 = por %p113, %p114
      %p116 = scmp.ne.s32.totalorder %s107, %s108
      %p117 = scmp.eq.s32.totalorder %s19, 0
      %p118 = por %p116, %p117
      %p119 = scmp.ne.s32.totalorder %s107, %s108
      %p120 = scmp.eq.s32.totalorder %s20, 5
      %p121 = por %p119, %p120
      %p123 = scmp.ne.s32.totalorder %s108, %s122
      %p124 = scmp.eq.s32.totalorder %s20, 0
      %p125 = por %p123, %p124
      %s127 = sadd.s32 %s126, 1
      %p130 = scmp.eq.s32.totalorder %s14, 5
      %p131 = scmp.ne.s32.totalorder %s126, %s128
      %p132 = scmp.eq.s32.totalorder %s14, 0
      %p133 = por %p131, %p132
      %p134 = scmp.ne.s32.totalorder %s126, %s128
      %p135 = scmp.eq.s32.totalorder %s19, 5
      %p136 = por %p134, %p135
      %p137 = scmp.ne.s32.totalorder %s128, %s129
      %p138 = scmp.eq.s32.totalorder %s19, 0
      %p139 = por %p137, %p138
      %p140 = scmp.ne.s32.totalorder %s128, %s129
      %p141 = scmp.eq.s32.totalorder %s20, 5
      %p142 = por %p140, %p141
      %p144 = scmp.ne.s32.totalorder %s129, %s143
      %p145 = scmp.eq.s32.totalorder %s20, 0
      %p146 = por %p144, %p145
      %s148 = sadd.s32 %s147, 1
      %p151 = scmp.eq.s32.totalorder %s14, 5
      %p152 = scmp.ne.s32.totalorder %s147, %s149
      %p153 = scmp.eq.s32.totalorder %s14, 0
      %p154 = por %p152, %p153
      %p155 = scmp.ne.s32.totalorder %s147, %s149
      %p156 = scmp.eq.s32.totalorder %s19, 5
      %p157 = por %p155, %p156
      %p158 = scmp.ne.s32.totalorder %s149, %s150
      %p159 = scmp.eq.s32.totalorder %s19, 0
      %p160 = por %p158, %p159
      %p161 = scmp.ne.s32.totalorder %s149, %s150
      %p162 = scmp.eq.s32.totalorder %s20, 5
      %p163 = por %p161, %p162
      %p165 = scmp.ne.s32.totalorder %s150, %s164
      %p166 = scmp.eq.s32.totalorder %s20, 0
      %p167 = por %p165, %p166
      %p168 = scmp.eq.s32.totalorder %s22, 2
      %s169 = scalar_select %p168, %s23, 0
      %p170 = scmp.eq.s32.totalorder %s36, 2
      %s171 = scalar_select %p170, %s32, 0
      %s172 = ssub.s32 %s21, %s40
      %s173 = ssub.s32 %s169, %s171
      %s174 = sor.u32 %s172, %s173
      %p175 = scmp.eq.s32.totalorder %s174, 0
      %s177 = sadd.s32 %s176, 1
      %s178 = scalar_select %p175, %s176, %s177
      %p181 = pneg %p175
      %p182 = scmp.eq.s32.totalorder %s14, 5
      %p183 = por %p181, %p182
      %p184 = scmp.ne.s32.totalorder %s176, %s179
      %p185 = scmp.eq.s32.totalorder %s14, 0
      %p186 = por %p184, %p185
      %p187 = scmp.ne.s32.totalorder %s176, %s179
      %p188 = scmp.eq.s32.totalorder %s19, 5
      %p189 = por %p187, %p188
      %p190 = scmp.ne.s32.totalorder %s179, %s180
      %p191 = scmp.eq.s32.totalorder %s19, 0
      %p192 = por %p190, %p191
      %p193 = scmp.ne.s32.totalorder %s179, %s180
      %p194 = scmp.eq.s32.totalorder %s20, 5
      %p195 = por %p193, %p194
      %p197 = scmp.ne.s32.totalorder %s180, %s196
      %p198 = scmp.eq.s32.totalorder %s20, 0
      %p199 = por %p197, %p198
      %p200 = scmp.le.s32.totalorder 1, %s14
      %p201 = scmp.lt.s32.totalorder %s14, 7
      %p202 = pnand %p200, %p201
      %p203 = pneg %p202
      // Predicated region
      $region9: #{tpu_custom_call.1} parent=5 // pred_check
        _
      $region10: #{tpu_custom_call.1} parent=5 // pred_check_branch
        %205 = sbr.rel (%p202) target = $region12
      $region11: #{tpu_custom_call.1} parent=5 // pred_region
        %s206 = ssub.s32 %s14, 1
        // Predicated region
        $region13: #{tpu_custom_call.1} parent=11 // pred_check
          %p207 = pneg %p118
        $region14: #{tpu_custom_call.1} parent=11 // pred_check_branch
          %209 = sbr.rel (%p207) target = $region16
        $region15: #{tpu_custom_call.1} parent=11 // pred_region
          _
        $region16: #{tpu_custom_call.1} parent=11 // pred_fallthru
          _
        // Predicated region
        $region17: #{tpu_custom_call.1} parent=11 // pred_check
          %p210 = pneg %p139
        $region18: #{tpu_custom_call.1} parent=11 // pred_check_branch
          %212 = sbr.rel (%p210) target = $region20
        $region19: #{tpu_custom_call.1} parent=11 // pred_region
          _
        $region20: #{tpu_custom_call.1} parent=11 // pred_fallthru
          _
        // Predicated region
        $region21: #{tpu_custom_call.1} parent=11 // pred_check
          %p213 = pneg %p160
        $region22: #{tpu_custom_call.1} parent=11 // pred_check_branch
          %215 = sbr.rel (%p213) target = $region24
        $region23: #{tpu_custom_call.1} parent=11 // pred_region
          _
        $region24: #{tpu_custom_call.1} parent=11 // pred_fallthru
          _
      $region12: #{tpu_custom_call.1} parent=5 // pred_fallthru
        _
      %p216 = scmp.lt.s32.totalorder %s14, 6
      // Predicated region
      $region25: #{tpu_custom_call.1} parent=5 // pred_check
        %p217 = pneg %p216
      $region26: #{tpu_custom_call.1} parent=5 // pred_check_branch
        %219 = sbr.rel (%p217) target = $region28
      $region27: #{tpu_custom_call.1} parent=5 // pred_region
        // Predicated region
        $region29: #{tpu_custom_call.1} parent=27 // pred_check
          %p220 = pneg %p59
        $region30: #{tpu_custom_call.1} parent=27 // pred_check_branch
          %222 = sbr.rel (%p220) target = $region32
        $region31: #{tpu_custom_call.1} parent=27 // pred_region
          %p223 = scmp.eq.s32.totalorder %s22, 0
          %s224 = scalar_select %p223, %s23, 0
          %s225 = smul.u32 2, %s224
          %p226 = scmp.lt.s32.totalorder %s21, 1
          %s227 = scalar_select %p226, %s21, 1
          %p228 = scmp.lt.s32.totalorder %s225, 1
          %s229 = scalar_select %p228, %s225, 1
          %s230 = smul.addr %s227, 2
          %s231 = sadd.s32 %s229, %s230
          %s232 = smul.addr %s231, 2
          %s233 = scalar_lea.vmem %s0, %s232
          %p234 = scmp.eq.s32.totalorder %s22, 0
          %s235 = scalar_select %p234, %s23, 0
          %s236 = smul.u32 2, %s235
        $region32: #{tpu_custom_call.1} parent=27 // pred_fallthru
          _
        // Predicated region
        $region33: #{tpu_custom_call.1} parent=27 // pred_check
          %p237 = pneg %p91
        $region34: #{tpu_custom_call.1} parent=27 // pred_check_branch
          %239 = sbr.rel (%p237) target = $region36
        $region35: #{tpu_custom_call.1} parent=27 // pred_region
          %p240 = scmp.eq.s32.totalorder %s22, 1
          %s241 = scalar_select %p240, 0, %s23
          %s242 = smul.u32 2, %s241
          %p243 = scmp.lt.s32.totalorder %s21, 1
          %s244 = scalar_select %p243, %s21, 1
          %p245 = scmp.lt.s32.totalorder %s242, 1
          %s246 = scalar_select %p245, %s242, 1
          %s247 = smul.addr %s244, 2
          %s248 = sadd.s32 %s246, %s247
          %s249 = smul.addr %s248, 2
          %s250 = scalar_lea.vmem %s1, %s249
          %p251 = scmp.eq.s32.totalorder %s22, 1
          %s252 = scalar_select %p251, 0, %s23
          %s253 = smul.u32 2, %s252
        $region36: #{tpu_custom_call.1} parent=27 // pred_fallthru
          _
      $region28: #{tpu_custom_call.1} parent=5 // pred_fallthru
        _
      %p254 = scmp.le.s32.totalorder 1, %s14
      %p255 = scmp.lt.s32.totalorder %s14, 7
      %p256 = pnand %p254, %p255
      %p257 = pneg %p256
      // Predicated region
      $region37: #{tpu_custom_call.1} parent=5 // pred_check
        _
      $region38: #{tpu_custom_call.1} parent=5 // pred_check_branch
        %259 = sbr.rel (%p256) target = $region40
      $region39: #{tpu_custom_call.1} parent=5 // pred_region
        %s260 = ssub.s32 %s14, 1
        %p261 = scmp.eq.s32.totalorder %s25, 0
        %s262 = scalar_select %p261, %s26, 0
        %s263 = smul.u32 2, %s262
        %p264 = scmp.lt.s32.totalorder %s24, 1
        %s265 = scalar_select %p264, %s24, 1
        %p266 = scmp.lt.s32.totalorder %s263, 1
        %s267 = scalar_select %p266, %s263, 1
        %s268 = smul.addr %s265, 2
        %s269 = sadd.s32 %s267, %s268
        %s270 = smul.addr %s269, 2
        %s271 = scalar_lea.vmem %s0, %s270
        %p272 = pneg %p65
        %p273 = pneg %p62
        %p274 = scmp.eq.s32.totalorder %s25, 1
        %s275 = scalar_select %p274, 0, %s26
        %s276 = smul.u32 2, %s275
        %p277 = scmp.lt.s32.totalorder %s24, 1
        %s278 = scalar_select %p277, %s24, 1
        %p279 = scmp.lt.s32.totalorder %s276, 1
        %s280 = scalar_select %p279, %s276, 1
        %s281 = smul.addr %s278, 2
        %s282 = sadd.s32 %s280, %s281
        %s283 = smul.addr %s282, 2
        %s284 = scalar_lea.vmem %s1, %s283
        %p285 = pneg %p97
        %p286 = pneg %p94
        %p287 = pneg %p118
        %p288 = pneg %p115
        %p289 = pneg %p139
        %p290 = pneg %p136
        %p291 = pneg %p160
        %p292 = pneg %p157
        %p293 = pneg %p192
        %p294 = pneg %p189
        %s295 = sand.u32 %s179, 1
        %s296 = scalar_lea.sflag [#allocation12], %s295
        %s297 = sand.u32 %s179, 1
        %s298 = smul.addr %s297, 4
        %s299 = scalar_lea.vmem [#allocation11], %s298
        %p300 = scmp.eq.s32.totalorder %s25, 0
        %s301 = scalar_select %p300, %s26, 0
        %s302 = smul.u32 2, %s301
        %p303 = scmp.lt.s32.totalorder %s24, 1
        %s304 = scalar_select %p303, %s24, 1
        %p305 = scmp.lt.s32.totalorder %s302, 1
        %s306 = scalar_select %p305, %s302, 1
        %s307 = smul.addr %s304, 2
        %s308 = sadd.s32 %s306, %s307
        %s309 = smul.addr %s308, 2
        %s310 = scalar_lea.vmem %s0, %s309
        %p311 = scmp.eq.s32.totalorder %s25, 0
        %s312 = scalar_select %p311, %s26, 0
        %s313 = smul.u32 2, %s312
        %p314 = scmp.eq.s32.totalorder %s25, 1
        %s315 = scalar_select %p314, 0, %s26
        %s316 = smul.u32 2, %s315
        %p317 = scmp.lt.s32.totalorder %s24, 1
        %s318 = scalar_select %p317, %s24, 1
        %p319 = scmp.lt.s32.totalorder %s316, 1
        %s320 = scalar_select %p319, %s316, 1
        %s321 = smul.addr %s318, 2
        %s322 = sadd.s32 %s320, %s321
        %s323 = smul.addr %s322, 2
        %s324 = scalar_lea.vmem %s1, %s323
        %p325 = scmp.eq.s32.totalorder %s25, 1
        %s326 = scalar_select %p325, 0, %s26
        %s327 = smul.u32 2, %s326
        %p328 = scmp.eq.s32.totalorder %s25, 2
        %s329 = scalar_select %p328, %s26, 0
        %s330 = smul.u32 2, %s329
        %p332 = scmp.eq.s32.totalorder %s25, 0
        %p333 = scmp.eq.s32.totalorder %s26, 0
        %p334 = pnand %p332, %p333
        %p335 = pneg %p334
        // Predicated region
        $region41: #{tpu_custom_call.1} parent=39 // pred_check
          _
        $region42: #{tpu_custom_call.1} parent=39 // pred_check_branch
          %337 = sbr.rel (%p334) target = $region44
        $region43: #{tpu_custom_call.1} parent=39 // pred_region
          %vm338 = vcmask 7168
          %339 = vst.msk [vmem:[#allocation2] sm:$0xff] %vm338, 0.0
          %340 = vst.msk [vmem:[#allocation3] sm:$0xff] %vm338, 0.0
          %341 = vst.msk [vmem:[#allocation4] sm:$0xff] %vm338, 0.0
          %342 = vst.msk [vmem:[#allocation5] sm:$0xff] %vm338, 0.0
          %vm343 = vcmask 0
          %344 = vst.msk [vmem:[#allocation6] sm:$0x1] %vm343, 0.0
          %345 = vst.msk [vmem:[#allocation7] sm:$0x1] %vm343, 0.0
        $region44: #{tpu_custom_call.1} parent=39 // pred_fallthru
          _
        // Predicated region
        $region45: #{tpu_custom_call.1} parent=39 // pred_check
          %p346 = pneg %p332
        $region46: #{tpu_custom_call.1} parent=39 // pred_check_branch
          %348 = sbr.rel (%p346) target = $region48
        $region47: #{tpu_custom_call.1} parent=39 // pred_region
          %v349 = vld [vmem:[%s2] sm:$0xf]
          %v350 = vld [vmem:[%s310] sm:$0xf]
          %v353 = vunpack.c.l.s4 1983009808
          %v354 = vunpack.c.0.s8 %v353
          %v355 = vlaneseq
          %v356 = vshrl.u32 %v355, 7
          %v357 = vsub.s32 %v354, %v356
          %v358 = vrot.slane %v350, %v357
          %v359 = vcombine.high %v358, %v358
          %vm360 = vcmask 31744
          %v362 = vsel %vm360, %v349, 0
          %vm364 = vcmask 1041408
          %v366 = vsel %vm364, %v358, 0
          %v369 = vsel %vm364, %v359, 0
          %371 = vmatprep.subr.bf16.mxu0 0
          %372 = vmatpush1.bf16.msra.mxu0 0
          %373 = vmatprep.subr.bf16.mxu0 0
          %374 = vmatpush1.bf16.msra.mxu0 0
          %375 = vmatprep.subr.bf16.mxu0 0
          %376 = vmatpush1.bf16.msra.mxu0 0
          %377 = vmatprep.subr.bf16.mxu0 0
          %378 = vmatpush1.bf16.msra.mxu0 0
          %379 = vmatprep.subr.bf16.mxu0 0
          %380 = vmatpush1.bf16.msra.mxu0 0
          %381 = vmatprep.subr.bf16.mxu0 0
          %382 = vmatpush1.bf16.msra.mxu0 0
          %383 = vmatprep.subr.bf16.mxu0 0
          %384 = vmatpush1.bf16.msra.mxu0 0
          %385 = vmatprep.subr.bf16.mxu0 %v369
          %386 = vmatpush1.bf16.msra.mxu0 %v366
          %387 = vmatprep.subr.bf16.mxu0 0
          %388 = vmatpush2.bf16.msra.mxu0 0
          %389 = vmatprep.subr.bf16.mxu0 0
          %390 = vmatpush2.bf16.msra.mxu0 0
          %391 = vmatprep.subr.bf16.mxu0 0
          %392 = vmatpush2.bf16.msra.mxu0 0
          %393 = vmatprep.subr.bf16.mxu0 0
          %394 = vmatpush2.bf16.msra.mxu0 0
          %395 = vmatprep.subr.bf16.mxu0 0
          %396 = vmatpush2.bf16.msra.mxu0 0
          %397 = vmatprep.subr.bf16.mxu0 0
          %398 = vmatpush2.bf16.msra.mxu0 0
          %399 = vmatprep.subr.bf16.mxu0 0
          %400 = vmatpush2.bf16.msra.mxu0 0
          %401 = vmatprep.subr.bf16.mxu0 0
          %402 = vmatpush2.bf16.msra.mxu0 0
          %403 = vmatprep.mubr.bf16.mxu0 0
          %404 = vmatmul.mubr.bf16.gmra.mxu0 %v362
          %v405 = vpop.f32.mrf.mxu0
          %v406 = vadd.f32 0.0, %v405
          %v407 = vpop.f32.mrf.mxu0
          %v408 = vadd.f32 0.0, %v407
          %v409 = vpop.f32.mrf.mxu0
          %v410 = vpop.f32.mrf.mxu0
          %411 = vdwg.mxu0
          %v412 = vld [vmem:[%s3] sm:$0xf]
          %v413 = vld [vmem:[%s324] sm:$0xf]
          %v416 = vunpack.c.l.s4 1983009808
          %v417 = vunpack.c.0.s8 %v416
          %v418 = vlaneseq
          %v419 = vshrl.u32 %v418, 7
          %v420 = vsub.s32 %v417, %v419
          %v421 = vrot.slane %v413, %v420
          %v422 = vcombine.high %v421, %v421
          %v424 = vsel %vm360, %v412, 0
          %v427 = vsel %vm364, %v421, 0
          %v430 = vsel %vm364, %v422, 0
          %432 = vmatprep.subr.bf16.mxu0 0
          %433 = vmatpush1.bf16.msra.mxu0 0
          %434 = vmatprep.subr.bf16.mxu0 0
          %435 = vmatpush1.bf16.msra.mxu0 0
          %436 = vmatprep.subr.bf16.mxu0 0
          %437 = vmatpush1.bf16.msra.mxu0 0
          %438 = vmatprep.subr.bf16.mxu0 0
          %439 = vmatpush1.bf16.msra.mxu0 0
          %440 = vmatprep.subr.bf16.mxu0 0
          %441 = vmatpush1.bf16.msra.mxu0 0
          %442 = vmatprep.subr.bf16.mxu0 0
          %443 = vmatpush1.bf16.msra.mxu0 0
          %444 = vmatprep.subr.bf16.mxu0 0
          %445 = vmatpush1.bf16.msra.mxu0 0
          %446 = vmatprep.subr.bf16.mxu0 %v430
          %447 = vmatpush1.bf16.msra.mxu0 %v427
          %448 = vmatprep.subr.bf16.mxu0 0
          %449 = vmatpush2.bf16.msra.mxu0 0
          %450 = vmatprep.subr.bf16.mxu0 0
          %451 = vmatpush2.bf16.msra.mxu0 0
          %452 = vmatprep.subr.bf16.mxu0 0
          %453 = vmatpush2.bf16.msra.mxu0 0
          %454 = vmatprep.subr.bf16.mxu0 0
          %455 = vmatpush2.bf16.msra.mxu0 0
          %456 = vmatprep.subr.bf16.mxu0 0
          %457 = vmatpush2.bf16.msra.mxu0 0
          %458 = vmatprep.subr.bf16.mxu0 0
          %459 = vmatpush2.bf16.msra.mxu0 0
          %460 = vmatprep.subr.bf16.mxu0 0
          %461 = vmatpush2.bf16.msra.mxu0 0
          %462 = vmatprep.subr.bf16.mxu0 0
          %463 = vmatpush2.bf16.msra.mxu0 0
          %464 = vmatprep.mubr.bf16.mxu0 0
          %465 = vmatmul.mubr.bf16.gmra.mxu0 %v424
          %v466 = vpop.f32.mrf.mxu0
          %v467 = vadd.f32 0.0, %v466
          %v468 = vpop.f32.mrf.mxu0
          %v469 = vadd.f32 0.0, %v468
          %v470 = vpop.f32.mrf.mxu0
          %v471 = vpop.f32.mrf.mxu0
          %472 = vdwg.mxu0
          %v473 = vpack.c.bf16 %v406, %v406
          %v474 = vpack.c.bf16 %v408, %v408
          %v477 = vunpack.c.l.b16 %v473
          %v478 = vunpack.c.l.b16 %v474
          %v479 = vpack.c.b16 %v478, %v477
          %s481 = smul.u32 %s26, 2
          %s482 = smul.addr %s481, 4
          %s483 = scalar_lea.vmem [#allocation9], %s482
          %484 = vst [vmem:[%s483] sm:$0xff] %v479
          %v485 = vpack.c.bf16 %v467, %v467
          %v486 = vpack.c.bf16 %v469, %v469
          %v489 = vunpack.c.l.b16 %v485
          %v490 = vunpack.c.l.b16 %v486
          %v491 = vpack.c.b16 %v490, %v489
          %s493 = smul.addr %s481, 4
          %s494 = scalar_lea.vmem [#allocation10], %s493
          %495 = vst [vmem:[%s494] sm:$0xff] %v491
          %v496 = vld [vmem:[#allocation2] sm:$0xff]
          %v497 = vadd.f32 %v406, %v408
          %498 = vadd.xlane.f32.xlu0 %v497
          %v499 = vpop.xlane.xlu0 %498
          %v500 = vadd.f32 %v496, %v499
          %vm501 = vcmask 7168
          %502 = vst.msk [vmem:[#allocation2] sm:$0xff] %vm501, %v500
          %v503 = vld [vmem:[#allocation3] sm:$0xff]
          %v504 = vmul.f32 %v406, %v406
          %v505 = vmul.f32 %v408, %v408
          %v506 = vadd.f32 %v504, %v505
          %507 = vadd.xlane.f32.xlu0 %v506
          %v508 = vpop.xlane.xlu0 %507
          %v509 = vadd.f32 %v503, %v508
          %510 = vst.msk [vmem:[#allocation3] sm:$0xff] %vm501, %v509
          %v511 = vld [vmem:[#allocation4] sm:$0xff]
          %v512 = vadd.f32 %v467, %v469
          %513 = vadd.xlane.f32.xlu0 %v512
          %v514 = vpop.xlane.xlu0 %513
          %v515 = vadd.f32 %v511, %v514
          %516 = vst.msk [vmem:[#allocation4] sm:$0xff] %vm501, %v515
          %v517 = vld [vmem:[#allocation5] sm:$0xff]
          %v518 = vmul.f32 %v467, %v467
          %v519 = vmul.f32 %v469, %v469
          %v520 = vadd.f32 %v518, %v519
          %521 = vadd.xlane.f32.xlu0 %v520
          %v522 = vpop.xlane.xlu0 %521
          %v523 = vadd.f32 %v517, %v522
          %524 = vst.msk [vmem:[#allocation5] sm:$0xff] %vm501, %v523
        $region48: #{tpu_custom_call.1} parent=39 // pred_fallthru
          _
        %p525 = scmp.eq.s32.totalorder %s25, 1
        // Predicated region
        $region49: #{tpu_custom_call.1} parent=39 // pred_check
          %p526 = pneg %p525
        $region50: #{tpu_custom_call.1} parent=39 // pred_check_branch
          %528 = sbr.rel (%p526) target = $region52
        $region51: #{tpu_custom_call.1} parent=39 // pred_region
          %s529 = smul.u32 %s26, 2
          %s530 = smul.addr %s529, 4
          %s531 = scalar_lea.vmem [#allocation9], %s530
          %v532 = vld [vmem:[%s531] sm:$0xff]
          %v533 = vunpack.c.l.bf16 %v532
          %v534 = vunpack.c.h.bf16 %v532
          %s535 = smul.addr %s529, 4
          %s536 = scalar_lea.vmem [#allocation10], %s535
          %v537 = vld [vmem:[%s536] sm:$0xff]
          %v538 = vunpack.c.l.bf16 %v537
          %v539 = vunpack.c.h.bf16 %v537
          %v540 = vld [vmem:[#allocation2] sm:$0xff]
          %v541 = vmul.f32 %v540, 0.00390625
          %v542 = vld [vmem:[#allocation3] sm:$0xff]
          %v543 = vmul.f32 %v542, 0.00390625
          %v544 = vmul.f32 %v541, %v541
          %v545 = vsub.f32 %v543, %v544
          %v546 = vmax.f32 %v545, 0.0
          %v547 = vld [vmem:[#allocation4] sm:$0xff]
          %v548 = vmul.f32 %v547, 0.00390625
          %v549 = vld [vmem:[#allocation5] sm:$0xff]
          %v550 = vmul.f32 %v549, 0.00390625
          %v551 = vmul.f32 %v548, %v548
          %v552 = vsub.f32 %v550, %v551
          %v553 = vmax.f32 %v552, 0.0
          %555 = vset.pattern.permute.xlu0 0
          %556 = vperm.xlu0 %555, %v541
          %v557 = vpop.permute.xlu0 %556
          %v559 = vsub.f32 %v533, %v557
          %v560 = vsub.f32 %v534, %v557
          %v561 = vadd.f32 %v546, 1e-05
          %v562 = vrsqrt.pop %v561
          %564 = vset.pattern.permute.xlu0 0
          %565 = vperm.xlu0 %564, %v562
          %v566 = vpop.permute.xlu0 %565
          %v568 = vmul.f32 %v559, %v566
          %v569 = vmul.f32 %v560, %v566
          %571 = vset.pattern.permute.xlu0 0
          %572 = vperm.xlu0 %571, %v548
          %v573 = vpop.permute.xlu0 %572
          %v575 = vsub.f32 %v538, %v573
          %v576 = vsub.f32 %v539, %v573
          %v577 = vadd.f32 %v553, 1e-05
          %v578 = vrsqrt.pop %v577
          %580 = vset.pattern.permute.xlu0 0
          %581 = vperm.xlu0 %580, %v578
          %v582 = vpop.permute.xlu0 %581
          %v584 = vmul.f32 %v575, %v582
          %v585 = vmul.f32 %v576, %v582
          %v586 = vadd.f32 %v568, %v584
          %v587 = vadd.f32 %v569, %v585
          %v588 = vmax.f32 %v586, 0.0
          %v589 = vmax.f32 %v587, 0.0
          %v590 = vld [vmem:[%s4] sm:$0xff]
          %592 = vset.pattern.permute.xlu0 0
          %593 = vperm.xlu0 %592, %v590
          %v594 = vpop.permute.xlu0 %593
          %v596 = vmul.f32 %v594, %v588
          %v597 = vmul.f32 %v594, %v589
          %v598 = vrot.slane %v596, 4
          %v599 = vadd.f32 %v596, %v598
          %v600 = vrot.slane %v599, 2
          %v601 = vadd.f32 %v599, %v600
          %v602 = vrot.slane %v601, 1
          %v603 = vadd.f32 %v601, %v602
          %v604 = vrot.slane %v597, 4
          %v605 = vadd.f32 %v597, %v604
          %v606 = vrot.slane %v605, 2
          %v607 = vadd.f32 %v605, %v606
          %v608 = vrot.slane %v607, 1
          %v609 = vadd.f32 %v607, %v608
          %v612 = vcombine.low %v603, %v609
          %v614 = vunpack.c.l.s4 1966171168
          %v615 = vunpack.c.0.s8 %v614
          %v616 = vlaneseq
          %v617 = vshrl.u32 %v616, 7
          %v618 = vsub.s32 %v615, %v617
          %v619 = vrot.slane %v612, %v618
          %v621 = vunpack.c.l.s4 1966171168
          %v622 = vunpack.c.0.s8 %v621
          %v623 = vlaneseq
          %v624 = vshrl.u32 %v623, 7
          %v625 = vsub.s32 %v622, %v624
          %v626 = vrot.slane %v619, %v625
          %s628 = scalar_lea.vmem [#allocation8], %s529
          %v629 = vlaneseq
          %vm630 = vcmp.ge.s32.totalorder %v629, 0
          %vm631 = vcmp.lt.s32.totalorder %v629, 256
          %vm632 = vmand %vm630, %vm631
          %633 = vst.msk [vmem:[%s628] sm:$0x3] %vm632, %v626
          %v634 = vld [vmem:[#allocation6] sm:$0x1]
          %v635 = vadd.f32 %v603, %v609
          %636 = vadd.xlane.f32.xlu0 %v635
          %v637 = vpop.xlane.xlu0 %636
          %v638 = vadd.f32 %v634, %v637
          %vm639 = vcmask 0
          %640 = vst.msk [vmem:[#allocation6] sm:$0x1] %vm639, %v638
          %v641 = vld [vmem:[#allocation7] sm:$0x1]
          %v642 = vmul.f32 %v603, %v603
          %v643 = vmul.f32 %v609, %v609
          %v644 = vadd.f32 %v642, %v643
          %645 = vadd.xlane.f32.xlu0 %v644
          %v646 = vpop.xlane.xlu0 %645
          %v647 = vadd.f32 %v641, %v646
          %648 = vst.msk [vmem:[#allocation7] sm:$0x1] %vm639, %v647
        $region52: #{tpu_custom_call.1} parent=39 // pred_fallthru
          _
        %p649 = scmp.eq.s32.totalorder %s25, 2
        // Predicated region
        $region53: #{tpu_custom_call.1} parent=39 // pred_check
          %p650 = pneg %p649
        $region54: #{tpu_custom_call.1} parent=39 // pred_check_branch
          %652 = sbr.rel (%p650) target = $region56
        $region55: #{tpu_custom_call.1} parent=39 // pred_region
          %v653 = vld [vmem:[#allocation6] sm:$0x1]
          %v654 = vmul.f32 %v653, 0.00390625
          %v655 = vld [vmem:[#allocation7] sm:$0x1]
          %v656 = vmul.f32 %v655, 0.00390625
          %v657 = vmul.f32 %v654, %v654
          %v658 = vsub.f32 %v656, %v657
          %v659 = vmax.f32 %v658, 0.0
          %s660 = smul.u32 %s26, 2
          %s661 = scalar_lea.vmem [#allocation8], %s660
          %v662 = vld [vmem:[%s661] sm:$0x3]
          %664 = vset.pattern.permute.xlu0 0
          %665 = vperm.xlu0 %664, %v654
          %v666 = vpop.permute.xlu0 %665
          %v668 = vlaneseq
          %v669 = vshrl.u32 %v668, 7
          %v670 = vsub.s32 0, %v669
          %v671 = vrot.slane %v666, %v670
          %v672 = vsub.f32 %v662, %v671
          %v673 = vadd.f32 %v659, 1e-05
          %v674 = vrsqrt.pop %v673
          %676 = vset.pattern.permute.xlu0 0
          %677 = vperm.xlu0 %676, %v674
          %v678 = vpop.permute.xlu0 %677
          %v680 = vlaneseq
          %v681 = vshrl.u32 %v680, 7
          %v682 = vsub.s32 0, %v681
          %v683 = vrot.slane %v678, %v682
          %v684 = vmul.f32 %v672, %v683
          %v685 = vmax.f32 %v684, -60.0
          %v686 = vsub.f32 0.0, %v685
          %v687 = vmul.f32 %v686, 1.442695
          %v688 = vpow.pop %v687
          %v689 = vadd.f32 %v688, 1.0
          %v690 = vrcp.pop %v689
          %v691 = vmul.f32 %v689, %v690
          %v692 = vsub.f32 2.0, %v691
          %v693 = vmul.f32 %v690, %v692
          %v695 = vlaneseq
          %v696 = vshrl.u32 %v695, 7
          %v697 = vsub.s32 0, %v696
          %v698 = vrot.slane %v693, %v697
          %v699 = vlaneseq
          %v700 = vshrl.u32 %v699, 7
          %v701 = vsub.s32 1, %v700
          %v702 = vrot.slane %v693, %v701
          %v705 = vpack.c.bf16 %v698, %v698
          %v706 = vpack.c.bf16 %v702, %v702
          %v707 = vld [vmem:[%s324] sm:$0xf]
          %v709 = vpack.i.b16 %v705, %v705
          %v711 = vlaneseq
          %v712 = vshrl.u32 %v711, 7
          %v713 = vsub.s32 0, %v712
          %v714 = vrot.slane %v709, %v713
          %v716 = vpack.i.b16 %v706, %v706
          %v718 = vlaneseq
          %v719 = vshrl.u32 %v718, 7
          %v720 = vsub.s32 0, %v719
          %v721 = vrot.slane %v716, %v720
          %v724 = vunpack.c.l.s4 1983009808
          %v725 = vunpack.c.0.s8 %v724
          %v726 = vlaneseq
          %v727 = vshrl.u32 %v726, 7
          %v728 = vsub.s32 %v725, %v727
          %v729 = vrot.slane %v707, %v728
          %v730 = vcombine.high %v729, %v729
          %v733 = vmul.bf16 %v714, %v729
          %v734 = vmul.bf16 %v721, %v730
          %v737 = vcombine.low %v733, %v734
          %v739 = vunpack.c.l.s4 1983009808
          %v740 = vunpack.c.0.s8 %v739
          %v741 = vlaneseq
          %v742 = vshrl.u32 %v741, 7
          %v743 = vsub.s32 %v740, %v742
          %v744 = vrot.slane %v737, %v743
          %746 = vst [vmem:[%s299] sm:$0xf] %v744
        $region56: #{tpu_custom_call.1} parent=39 // pred_fallthru
          _
        %s747 = sand.u32 %s179, 1
        %s748 = scalar_lea.sflag [#allocation12], %s747
        %s749 = sand.u32 %s179, 1
        %s750 = smul.addr %s749, 4
        %s751 = scalar_lea.vmem [#allocation11], %s750
        // Predicated region
        $region57: #{tpu_custom_call.1} parent=39 // pred_check
          %p752 = pneg %p189
        $region58: #{tpu_custom_call.1} parent=39 // pred_check_branch
          %754 = sbr.rel (%p752) target = $region60
        $region59: #{tpu_custom_call.1} parent=39 // pred_region
          %p755 = scmp.eq.s32.totalorder %s25, 2
          %s756 = scalar_select %p755, %s26, 0
          %s757 = smul.u32 2, %s756
          %s759 = ssub.s32 64, 64
          %760 = vsyncadd %s748, %s759
          %s761 = smul.addr %s24, 2
          %s762 = sadd.s32 %s757, %s761
          %s763 = smul.addr %s762, 32
          %s764 = scalar_lea.hbm %s5, %s763
          %s766 = sshll.u32 %s751, 4
          %s767 = int_to_ptr.vmem [resolvable:$true] %s766
          %769 = dma.vmem_to_hbm [thread:$0]  %s767, 64, %s764, %s748
        $region60: #{tpu_custom_call.1} parent=39 // pred_fallthru
          _
      $region40: #{tpu_custom_call.1} parent=5 // pred_fallthru
        _
      %p770 = scmp.le.s32.totalorder 2, %s14
      // Predicated region
      $region61: #{tpu_custom_call.1} parent=5 // pred_check
        %p771 = pneg %p770
      $region62: #{tpu_custom_call.1} parent=5 // pred_check_branch
        %773 = sbr.rel (%p771) target = $region64
      $region63: #{tpu_custom_call.1} parent=5 // pred_region
        %s774 = ssub.s32 %s14, 2
        // Predicated region
        $region65: #{tpu_custom_call.1} parent=63 // pred_check
          %p775 = pneg %p195
        $region66: #{tpu_custom_call.1} parent=63 // pred_check_branch
          %777 = sbr.rel (%p775) target = $region68
        $region67: #{tpu_custom_call.1} parent=63 // pred_region
          %s778 = sand.u32 %s180, 1
          %s779 = scalar_lea.sflag [#allocation12], %s778
          %s780 = sand.u32 %s180, 1
          %s781 = smul.addr %s780, 4
          %s782 = scalar_lea.vmem [#allocation11], %s781
          %783 = dma.done %s779, 64
        $region68: #{tpu_custom_call.1} parent=63 // pred_fallthru
          _
      $region64: #{tpu_custom_call.1} parent=5 // pred_fallthru
        _
    $region6: #{tpu_custom_call.1} parent=1 // loop_footer
      %s18 = sadd.s32 1, %s14
    $region7: #{tpu_custom_call.1} parent=1 // loop_footer_branch
      %13 = sbr.rel target = $region3
    $region8: #{tpu_custom_call.1} parent=1 // loop_exit
      _
    %784 = vsyncpa [#allocation12], 1
    %s785 = scalar_lea.sflag [#allocation12], 1
    %786 = vsyncpa %s785, 1

</llo_original>
